<compile_context>
chip_gen: v7x
topology: tpu7x:2x2x1
jax: 0.10.0
libtpu: 0.0.40
codegen_flags: <defaults>
</compile_context>

<pallas_src>
import functools

import jax
import jax.numpy as jnp
from jax.experimental import pallas as pl
from jax.experimental.pallas import tpu as pltpu


def _fusion_kernel(*refs, num_graphs, c_out, b_blk, tile_nt, nt_total, nt_axis, ragged):
    # refs = (x_0, ..., x_{G-1}, w_full, bias, out)
    #   x_g    : (b_blk, c_in, tile_nt)       per-graph input tile (channels on sublanes)
    #   w_full : (G, 2*c_out, c_in)           rows [:c_out] = conv_0, rows [c_out:] = conv_adp[g]
    #   bias   : (c_out, 1)                   conv_adp bias
    #   out    : (b_blk, c_out, tile_nt)
    x_refs = refs[:num_graphs]
    w_ref, bias_ref, o_ref = refs[num_graphs], refs[num_graphs + 1], refs[num_graphs + 2]

    w = w_ref[...].astype(jnp.float32)          # (G, 2*c_out, c_in)  -- tiny, stays in vregs
    bias = bias_ref[...].astype(jnp.float32)    # (c_out, 1)

    if ragged:
        j = pl.program_id(nt_axis)
        lane = jax.lax.broadcasted_iota(jnp.int32, (1, tile_nt), 1)
        valid = (j * tile_nt + lane) < nt_total  # (1, tile_nt)

    for bb in range(b_blk):
        # Fused per-graph matmul: one MXU push gives both h_g and the conv_adp partial u_g.
        hs = []
        u = None
        for g in range(num_graphs):
            xg = x_refs[g][bb].astype(jnp.float32)                          # (c_in, tile_nt)
            hu = jnp.dot(w[g], xg, preferred_element_type=jnp.float32)      # (2*c_out, tile_nt)
            hs.append(hu[:c_out])                                           # h_g
            ug = hu[c_out:]                                                 # conv_adp partial
            u = ug if u is None else u + ug
        u = u + bias                                                        # lane-broadcast bias

        # Attention logits: <h_g, u> reduced over the channel (sublane) axis (XLU).
        logits = [jnp.sum(hs[g] * u, axis=0, keepdims=True) for g in range(num_graphs)]

        # Softmax over graphs without materializing a (G, tile_nt) array.
        m = logits[0]
        for g in range(1, num_graphs):
            m = jnp.maximum(m, logits[g])
        es = [jnp.exp(lg - m) for lg in logits]
        denom = es[0]
        for g in range(1, num_graphs):
            denom = denom + es[g]
        inv = pl.reciprocal(denom, approx=True)                             # EUP slot

        # Weighted sum of the per-graph conv_0 outputs.
        acc = es[0] * hs[0]
        for g in range(1, num_graphs):
            acc = acc + es[g] * hs[g]
        out = acc * inv
        if ragged:
            out = jnp.where(valid, out, 0.0)
        o_ref[bb] = out.astype(o_ref.dtype)


def micro_fusion_pallas(x_list, w_adp, b_adp, w0, *,
                        max_tile_nt=32768,
                        vmem_budget_bytes=20 * 1024 * 1024,
                        target_step_bytes=2 * 1024 * 1024):
    """x_list: list of (B, c_in, N, T) arrays (NCHW).  Returns (B, c_out, N, T)."""
    num_graphs = len(x_list)
    if num_graphs == 1:
        # Matches the PyTorch module: with a single graph the input is returned as-is.
        return x_list[0]

    B, c_in, N, T = x_list[0].shape
    c_out = w0.shape[0]
    NT = N * T
    in_dtype = x_list[0].dtype
    out_dtype = in_dtype
    in_itemsize = jnp.dtype(in_dtype).itemsize
    out_itemsize = jnp.dtype(out_dtype).itemsize

    # ---- VMEM-budgeted lane tile -------------------------------------------------
    # Per lane column: double-buffered I/O plus the f32 intermediates (G h's, u, acc, logits).
    io_per_col = num_graphs * c_in * in_itemsize + c_out * out_itemsize
    interm_per_col = (num_graphs + 3) * c_out * 4 + 4 * (num_graphs + 2)
    per_col = 2 * io_per_col + interm_per_col
    tile_cap = max(128, (vmem_budget_bytes // per_col) // 128 * 128)
    max_tile = min(max_tile_nt, tile_cap)

    if NT <= max_tile:
        tile_nt = NT                          # full extent (no 128-multiple requirement)
    else:
        tile_nt = max_tile                    # multiple of 128
    grid_nt = pl.cdiv(NT, tile_nt)
    ragged = (NT % tile_nt) != 0              # ragged tail handled in-kernel (no pad/slice)

    # ---- Batch blocking (amortize the per-grid-step overhead) ---------------------
    b_blk = 1
    for d in range(1, B + 1):
        if B % d:
            continue
        vmem_need = 2 * d * tile_nt * io_per_col + tile_nt * interm_per_col
        if d > 1 and vmem_need > vmem_budget_bytes:
            break
        b_blk = d
        if d * tile_nt * io_per_col >= target_step_bytes:
            break
    grid_b = B // b_blk

    # ---- Free reshapes + tiny weight prep (no transposes / casts of the big tensors) ----
    xs = [x.reshape(B, c_in, NT) for x in x_list]

    w0_2d = w0.reshape(c_out, c_in).astype(jnp.float32)                               # (c_out, c_in)
    wadp_g = jnp.transpose(
        w_adp.reshape(c_out, num_graphs, c_in), (1, 0, 2)).astype(jnp.float32)        # (G, c_out, c_in)
    w_full = jnp.concatenate(
        [jnp.broadcast_to(w0_2d[None], (num_graphs, c_out, c_in)), wadp_g], axis=1)   # (G, 2c_out, c_in)
    b2d = b_adp.reshape(c_out, 1).astype(jnp.float32)                                 # (c_out, 1)

    # ---- Grid: larger parallel axis first (keeps the v7x 2-TC split balanced) ------
    if grid_nt >= grid_b:
        grid = (grid_nt, grid_b)
        nt_axis = 0
        xmap = lambda j, b: (b, 0, j)
        wmap = lambda j, b: (0, 0, 0)
        bmap = lambda j, b: (0, 0)
    else:
        grid = (grid_b, grid_nt)
        nt_axis = 1
        xmap = lambda b, j: (b, 0, j)
        wmap = lambda b, j: (0, 0, 0)
        bmap = lambda b, j: (0, 0)

    kernel = functools.partial(
        _fusion_kernel, num_graphs=num_graphs, c_out=c_out, b_blk=b_blk,
        tile_nt=tile_nt, nt_total=NT, nt_axis=nt_axis, ragged=ragged)

    x_spec = pl.BlockSpec((b_blk, c_in, tile_nt), xmap)
    in_specs = [x_spec] * num_graphs + [
        pl.BlockSpec((num_graphs, 2 * c_out, c_in), wmap),
        pl.BlockSpec((c_out, 1), bmap),
    ]
    out_spec = pl.BlockSpec((b_blk, c_out, tile_nt), xmap)

    out = pl.pallas_call(
        kernel,
        out_shape=jax.ShapeDtypeStruct((B, c_out, NT), out_dtype),
        grid_spec=pltpu.PrefetchScalarGridSpec(
            num_scalar_prefetch=0,
            grid=grid,
            in_specs=in_specs,
            out_specs=out_spec),
        compiler_params=pltpu.CompilerParams(
            dimension_semantics=("parallel", "parallel"),
            vmem_limit_bytes=48 * 1024 * 1024),
    )(*xs, w_full, b2d)

    return out.reshape(B, c_out, N, T)


def micro_fusion_ref(x_list, w_adp, b_adp, w0):
    """Plain-JAX mirror of the PyTorch forward (NCHW), for verification."""
    c_out = w0.shape[0]
    u = jnp.einsum('oc,bcnt->bont', w_adp.reshape(c_out, -1),
                   jnp.concatenate(x_list, axis=1)) + b_adp[None, :, None, None]
    hs = [jnp.einsum('oc,bcnt->bont', w0.reshape(c_out, -1), xg) for xg in x_list]
    h = jnp.stack(hs, axis=-1)                       # (B, c_out, N, T, G)
    att = jnp.einsum('bcntg,bcnt->bntg', h, u)       # (B, N, T, G)
    att = jax.nn.softmax(att, axis=-1)
    return jnp.sum(att[:, None] * h, axis=-1)        # (B, c_out, N, T)


if __name__ == "__main__":
    # Small shapes: batch=2, c_in=4, c_out=8, nodes=16, timesteps=8, num_graphs=2
    # (N*T = 128 so the output tile is one lane-dense block; B_blk=2 exercises batch blocking.)
    B, c_in, c_out, N, T, G = 2, 4, 8, 16, 8, 2

    key = jax.random.PRNGKey(0)
    k_x0, k_x1, k_wadp, k_badp, k_w0 = jax.random.split(key, 5)

    x_list = [
        jax.random.normal(k_x0, (B, c_in, N, T), dtype=jnp.float32),
        jax.random.normal(k_x1, (B, c_in, N, T), dtype=jnp.float32),
    ]
    # Conv2d(c_in*G, c_out, 1x1, bias=True) weight (c_out, c_in*G, 1, 1); bias (c_out,)
    w_adp = jax.random.normal(k_wadp, (c_out, c_in * G, 1, 1), dtype=jnp.float32) * 0.1
    b_adp = jax.random.normal(k_badp, (c_out,), dtype=jnp.float32) * 0.1
    # Conv2d(c_in, c_out, 1x1, bias=False) weight (c_out, c_in, 1, 1)
    w0 = jax.random.normal(k_w0, (c_out, c_in, 1, 1), dtype=jnp.float32) * 0.1

    out = micro_fusion_pallas(x_list, w_adp, b_adp, w0)
    out = jax.block_until_ready(out)

    ref = micro_fusion_ref(x_list, w_adp, b_adp, w0)
    assert out.shape == (B, c_out, N, T), out.shape
    # Relaxed tolerance: the softmax denominator uses the EUP approx reciprocal.
    assert jnp.allclose(out, ref, atol=1e-3, rtol=1e-3), float(jnp.max(jnp.abs(out - ref)))

    print("KERNEL_OK")
</pallas_src>

<mosaic_0001>
module attributes {stable_mosaic.version = 11 : i64} {
  func.func @_fusion_kernel(%arg0: i32, %arg1: i32, %arg2: memref<2x4x128xf32, #tpu.memory_space<vmem>>, %arg3: memref<2x4x128xf32, #tpu.memory_space<vmem>>, %arg4: memref<2x16x4xf32, #tpu.memory_space<vmem>>, %arg5: memref<8x1xf32, #tpu.memory_space<vmem>>, %arg6: memref<2x8x128xf32, #tpu.memory_space<vmem>>) attributes {dimension_semantics = [#tpu.dimension_semantics<parallel>, #tpu.dimension_semantics<parallel>], iteration_bounds = array<i64: 1, 1>, scalar_prefetch = 0 : i64, scratch_operands = 0 : i64, tpu.core_type = #tpu.core_type<tc>, window_params = [{transform_indices = @transform_0, window_bounds = array<i64: 2, 4, 128>}, {transform_indices = @transform_1, window_bounds = array<i64: 2, 4, 128>}, {pipeline_mode = #tpu.pipeline_mode<synchronous>, transform_indices = @transform_2, window_bounds = array<i64: 2, 16, 4>}, {pipeline_mode = #tpu.pipeline_mode<synchronous>, transform_indices = @transform_3, window_bounds = array<i64: 8, 1>}, {transform_indices = @transform_4, window_bounds = array<i64: 2, 8, 128>}]} {
    %c0 = arith.constant 0 : index
    %c0_0 = arith.constant 0 : index
    %c0_1 = arith.constant 0 : index
    %0 = vector.load %arg4[%c0, %c0_0, %c0_1] : memref<2x16x4xf32, #tpu.memory_space<vmem>>, vector<2x16x4xf32>
    %c0_2 = arith.constant 0 : index
    %c0_3 = arith.constant 0 : index
    %1 = vector.load %arg5[%c0_2, %c0_3] : memref<8x1xf32, #tpu.memory_space<vmem>>, vector<8x1xf32>
    %c0_4 = arith.constant 0 : index
    %c0_5 = arith.constant 0 : index
    %c0_6 = arith.constant 0 : index
    %2 = vector.load %arg2[%c0_4, %c0_5, %c0_6] : memref<2x4x128xf32, #tpu.memory_space<vmem>>, vector<1x4x128xf32>
    %3 = vector.shape_cast %2 : vector<1x4x128xf32> to vector<4x128xf32>
    %4 = vector.extract_strided_slice %0 {offsets = [0, 0, 0], sizes = [1, 16, 4], strides = [1, 1, 1]} : vector<2x16x4xf32> to vector<1x16x4xf32>
    %5 = vector.shape_cast %4 : vector<1x16x4xf32> to vector<16x4xf32>
    %cst = arith.constant dense<0.000000e+00> : vector<16x128xf32>
    %6 = tpu.matmul %5, %3, %cst {dimension_numbers = #tpu.dot_dimension_numbers<[1], [0], [0], [1], [0, 0, 1, 1], [], []>} : vector<16x4xf32>, vector<4x128xf32>, vector<16x128xf32> -> vector<16x128xf32>
    %7 = vector.extract_strided_slice %6 {offsets = [0, 0], sizes = [8, 128], strides = [1, 1]} : vector<16x128xf32> to vector<8x128xf32>
    %8 = vector.extract_strided_slice %6 {offsets = [8, 0], sizes = [8, 128], strides = [1, 1]} : vector<16x128xf32> to vector<8x128xf32>
    %c0_7 = arith.constant 0 : index
    %c0_8 = arith.constant 0 : index
    %c0_9 = arith.constant 0 : index
    %9 = vector.load %arg3[%c0_7, %c0_8, %c0_9] : memref<2x4x128xf32, #tpu.memory_space<vmem>>, vector<1x4x128xf32>
    %10 = vector.shape_cast %9 : vector<1x4x128xf32> to vector<4x128xf32>
    %11 = vector.extract_strided_slice %0 {offsets = [1, 0, 0], sizes = [1, 16, 4], strides = [1, 1, 1]} : vector<2x16x4xf32> to vector<1x16x4xf32>
    %12 = vector.shape_cast %11 : vector<1x16x4xf32> to vector<16x4xf32>
    %cst_10 = arith.constant dense<0.000000e+00> : vector<16x128xf32>
    %13 = tpu.matmul %12, %10, %cst_10 {dimension_numbers = #tpu.dot_dimension_numbers<[1], [0], [0], [1], [0, 0, 1, 1], [], []>} : vector<16x4xf32>, vector<4x128xf32>, vector<16x128xf32> -> vector<16x128xf32>
    %14 = vector.extract_strided_slice %13 {offsets = [0, 0], sizes = [8, 128], strides = [1, 1]} : vector<16x128xf32> to vector<8x128xf32>
    %15 = vector.extract_strided_slice %13 {offsets = [8, 0], sizes = [8, 128], strides = [1, 1]} : vector<16x128xf32> to vector<8x128xf32>
    %16 = arith.addf %8, %15 : vector<8x128xf32>
    %17 = vector.broadcast %1 : vector<8x1xf32> to vector<8x128xf32>
    %18 = arith.addf %16, %17 : vector<8x128xf32>
    %19 = arith.mulf %7, %18 : vector<8x128xf32>
    %cst_11 = arith.constant dense<0.000000e+00> : vector<128xf32>
    %20 = vector.multi_reduction <add>, %19, %cst_11 [0] : vector<8x128xf32> to vector<128xf32>
    %21 = vector.shape_cast %20 : vector<128xf32> to vector<1x128xf32>
    %22 = arith.mulf %14, %18 : vector<8x128xf32>
    %cst_12 = arith.constant dense<0.000000e+00> : vector<128xf32>
    %23 = vector.multi_reduction <add>, %22, %cst_12 [0] : vector<8x128xf32> to vector<128xf32>
    %24 = vector.shape_cast %23 : vector<128xf32> to vector<1x128xf32>
    %25 = arith.maximumf %21, %24 : vector<1x128xf32>
    %26 = arith.subf %21, %25 : vector<1x128xf32>
    %27 = math.exp %26 : vector<1x128xf32>
    %28 = arith.subf %24, %25 : vector<1x128xf32>
    %29 = math.exp %28 : vector<1x128xf32>
    %30 = arith.addf %27, %29 : vector<1x128xf32>
    %31 = tpu.reciprocal %30 {approx = true} : vector<1x128xf32> -> vector<1x128xf32>
    %32 = vector.broadcast %27 : vector<1x128xf32> to vector<8x128xf32>
    %33 = arith.mulf %32, %7 : vector<8x128xf32>
    %34 = vector.broadcast %29 : vector<1x128xf32> to vector<8x128xf32>
    %35 = arith.mulf %34, %14 : vector<8x128xf32>
    %36 = arith.addf %33, %35 : vector<8x128xf32>
    %37 = vector.broadcast %31 : vector<1x128xf32> to vector<8x128xf32>
    %38 = arith.mulf %36, %37 : vector<8x128xf32>
    %c0_13 = arith.constant 0 : index
    %c0_14 = arith.constant 0 : index
    %c0_15 = arith.constant 0 : index
    %39 = vector.load %arg6[%c0_13, %c0_14, %c0_15] : memref<2x8x128xf32, #tpu.memory_space<vmem>>, vector<1x8x128xf32>
    %40 = vector.shape_cast %39 : vector<1x8x128xf32> to vector<8x128xf32>
    %41 = vector.shape_cast %38 : vector<8x128xf32> to vector<1x8x128xf32>
    tpu.vector_store %arg6[%c0_13, %c0_14, %c0_15], %41 {strides = array<i32>} : memref<2x8x128xf32, #tpu.memory_space<vmem>>, vector<1x8x128xf32>,
    %c1 = arith.constant 1 : index
    %c0_16 = arith.constant 0 : index
    %c0_17 = arith.constant 0 : index
    %42 = vector.load %arg2[%c1, %c0_16, %c0_17] : memref<2x4x128xf32, #tpu.memory_space<vmem>>, vector<1x4x128xf32>
    %43 = vector.shape_cast %42 : vector<1x4x128xf32> to vector<4x128xf32>
    %44 = vector.extract_strided_slice %0 {offsets = [0, 0, 0], sizes = [1, 16, 4], strides = [1, 1, 1]} : vector<2x16x4xf32> to vector<1x16x4xf32>
    %45 = vector.shape_cast %44 : vector<1x16x4xf32> to vector<16x4xf32>
    %cst_18 = arith.constant dense<0.000000e+00> : vector<16x128xf32>
    %46 = tpu.matmul %45, %43, %cst_18 {dimension_numbers = #tpu.dot_dimension_numbers<[1], [0], [0], [1], [0, 0, 1, 1], [], []>} : vector<16x4xf32>, vector<4x128xf32>, vector<16x128xf32> -> vector<16x128xf32>
    %47 = vector.extract_strided_slice %46 {offsets = [0, 0], sizes = [8, 128], strides = [1, 1]} : vector<16x128xf32> to vector<8x128xf32>
    %48 = vector.extract_strided_slice %46 {offsets = [8, 0], sizes = [8, 128], strides = [1, 1]} : vector<16x128xf32> to vector<8x128xf32>
    %c1_19 = arith.constant 1 : index
    %c0_20 = arith.constant 0 : index
    %c0_21 = arith.constant 0 : index
    %49 = vector.load %arg3[%c1_19, %c0_20, %c0_21] : memref<2x4x128xf32, #tpu.memory_space<vmem>>, vector<1x4x128xf32>
    %50 = vector.shape_cast %49 : vector<1x4x128xf32> to vector<4x128xf32>
    %51 = vector.extract_strided_slice %0 {offsets = [1, 0, 0], sizes = [1, 16, 4], strides = [1, 1, 1]} : vector<2x16x4xf32> to vector<1x16x4xf32>
    %52 = vector.shape_cast %51 : vector<1x16x4xf32> to vector<16x4xf32>
    %cst_22 = arith.constant dense<0.000000e+00> : vector<16x128xf32>
    %53 = tpu.matmul %52, %50, %cst_22 {dimension_numbers = #tpu.dot_dimension_numbers<[1], [0], [0], [1], [0, 0, 1, 1], [], []>} : vector<16x4xf32>, vector<4x128xf32>, vector<16x128xf32> -> vector<16x128xf32>
    %54 = vector.extract_strided_slice %53 {offsets = [0, 0], sizes = [8, 128], strides = [1, 1]} : vector<16x128xf32> to vector<8x128xf32>
    %55 = vector.extract_strided_slice %53 {offsets = [8, 0], sizes = [8, 128], strides = [1, 1]} : vector<16x128xf32> to vector<8x128xf32>
    %56 = arith.addf %48, %55 : vector<8x128xf32>
    %57 = vector.broadcast %1 : vector<8x1xf32> to vector<8x128xf32>
    %58 = arith.addf %56, %57 : vector<8x128xf32>
    %59 = arith.mulf %47, %58 : vector<8x128xf32>
    %cst_23 = arith.constant dense<0.000000e+00> : vector<128xf32>
    %60 = vector.multi_reduction <add>, %59, %cst_23 [0] : vector<8x128xf32> to vector<128xf32>
    %61 = vector.shape_cast %60 : vector<128xf32> to vector<1x128xf32>
    %62 = arith.mulf %54, %58 : vector<8x128xf32>
    %cst_24 = arith.constant dense<0.000000e+00> : vector<128xf32>
    %63 = vector.multi_reduction <add>, %62, %cst_24 [0] : vector<8x128xf32> to vector<128xf32>
    %64 = vector.shape_cast %63 : vector<128xf32> to vector<1x128xf32>
    %65 = arith.maximumf %61, %64 : vector<1x128xf32>
    %66 = arith.subf %61, %65 : vector<1x128xf32>
    %67 = math.exp %66 : vector<1x128xf32>
    %68 = arith.subf %64, %65 : vector<1x128xf32>
    %69 = math.exp %68 : vector<1x128xf32>
    %70 = arith.addf %67, %69 : vector<1x128xf32>
    %71 = tpu.reciprocal %70 {approx = true} : vector<1x128xf32> -> vector<1x128xf32>
    %72 = vector.broadcast %67 : vector<1x128xf32> to vector<8x128xf32>
    %73 = arith.mulf %72, %47 : vector<8x128xf32>
    %74 = vector.broadcast %69 : vector<1x128xf32> to vector<8x128xf32>
    %75 = arith.mulf %74, %54 : vector<8x128xf32>
    %76 = arith.addf %73, %75 : vector<8x128xf32>
    %77 = vector.broadcast %71 : vector<1x128xf32> to vector<8x128xf32>
    %78 = arith.mulf %76, %77 : vector<8x128xf32>
    %c1_25 = arith.constant 1 : index
    %c0_26 = arith.constant 0 : index
    %c0_27 = arith.constant 0 : index
    %79 = vector.load %arg6[%c1_25, %c0_26, %c0_27] : memref<2x8x128xf32, #tpu.memory_space<vmem>>, vector<1x8x128xf32>
    %80 = vector.shape_cast %79 : vector<1x8x128xf32> to vector<8x128xf32>
    %81 = vector.shape_cast %78 : vector<8x128xf32> to vector<1x8x128xf32>
    tpu.vector_store %arg6[%c1_25, %c0_26, %c0_27], %81 {strides = array<i32>} : memref<2x8x128xf32, #tpu.memory_space<vmem>>, vector<1x8x128xf32>,
    return
  }
  func.func @transform_0(%arg0: i32, %arg1: i32) -> (i32, i32, i32) {
    %c0_i32 = arith.constant 0 : i32
    %c0_i32_0 = arith.constant 0 : i32
    return %arg1, %c0_i32, %arg0 : i32, i32, i32
  }
  func.func @transform_1(%arg0: i32, %arg1: i32) -> (i32, i32, i32) {
    %c0_i32 = arith.constant 0 : i32
    %c0_i32_0 = arith.constant 0 : i32
    return %arg1, %c0_i32, %arg0 : i32, i32, i32
  }
  func.func @transform_2(%arg0: i32, %arg1: i32) -> (i32, i32, i32) {
    %c0_i32 = arith.constant 0 : i32
    %c0_i32_0 = arith.constant 0 : i32
    %c0_i32_1 = arith.constant 0 : i32
    %c0_i32_2 = arith.constant 0 : i32
    return %c0_i32, %c0_i32_0, %c0_i32_1 : i32, i32, i32
  }
  func.func @transform_3(%arg0: i32, %arg1: i32) -> (i32, i32) {
    %c0_i32 = arith.constant 0 : i32
    %c0_i32_0 = arith.constant 0 : i32
    %c0_i32_1 = arith.constant 0 : i32
    return %c0_i32, %c0_i32_0 : i32, i32
  }
  func.func @transform_4(%arg0: i32, %arg1: i32) -> (i32, i32, i32) {
    %c0_i32 = arith.constant 0 : i32
    %c0_i32_0 = arith.constant 0 : i32
    return %arg1, %c0_i32, %arg0 : i32, i32, i32
  }
}

</mosaic_0001>

<llo_original>
// kernel: tpu_custom_call.1
$region0: #{tpu_custom_call.1}
  #allocation0 [shape = 'u32[]', space=smem, size = 0x4, offset = 0x4, fixed_abs, tag = 'smem constant byte address 0x4 - core index']
  #allocation1 [shape = 'u32[144,128]{1,0:T(1,128)}', space=vmem, size = 0x12000, scoped, tag = 'internal scratch']
  %s0 = inlined_call_operand.vmem [shape: f32[2,4,128], index: 0, kind: input, shape index: {}]
  %s1 = inlined_call_operand.vmem [shape: f32[2,4,128], index: 1, kind: input, shape index: {}]
  %s2 = inlined_call_operand.vmem [shape: f32[2,16,4], index: 2, kind: input, shape index: {}]
  %s3 = inlined_call_operand.vmem [shape: f32[8,1], index: 3, kind: input, shape index: {}]
  %s4 = inlined_call_operand.hbm [shape: f32[2,8,128], index: 4, kind: output, shape index: {}]
  %s5 = sld [smem:[#allocation0]]
  $region26: #{tpu_custom_call.1} parent=0
    _
  %s7 = ssub.s32 1, %s5
  %s8 = scalar_select 0, %s7, %s5
  $region1: #{tpu_custom_call.1} parent=0
    #allocation2 [shape = 'u8[8192]{0}', space=vmem, size = 0x2000, scoped, tag = 'output window, operand 0, single buffered']
    #allocation3 [shape = 's32[1]{0}', space=sflag, size = 0x4, scoped, tag = 'scoped memory for tpu_custom_call.1']
    %9 = vsyncpa [#allocation3], 0
    // Predicated region
    $region2: #{tpu_custom_call.1} parent=1 // pred_check
      _
    $region3: #{tpu_custom_call.1} parent=1 // pred_check_branch
      %11 = sbr.rel (0) target = $region5
    $region4: #{tpu_custom_call.1} parent=1 // pred_region
      _
    $region5: #{tpu_custom_call.1} parent=1 // pred_fallthru
      _
    // Predicated region
    $region6: #{tpu_custom_call.1} parent=1 // pred_check
      _
    $region7: #{tpu_custom_call.1} parent=1 // pred_check_branch
      %13 = sbr.rel (0) target = $region9
    $region8: #{tpu_custom_call.1} parent=1 // pred_region
      _
    $region9: #{tpu_custom_call.1} parent=1 // pred_fallthru
      _
    // Predicated region
    $region10: #{tpu_custom_call.1} parent=1 // pred_check
      _
    $region11: #{tpu_custom_call.1} parent=1 // pred_check_branch
      %15 = sbr.rel (0) target = $region13
    $region12: #{tpu_custom_call.1} parent=1 // pred_region
      _
    $region13: #{tpu_custom_call.1} parent=1 // pred_fallthru
      _
    // Predicated region
    $region14: #{tpu_custom_call.1} parent=1 // pred_check
      _
    $region15: #{tpu_custom_call.1} parent=1 // pred_check_branch
      %17 = sbr.rel (0) target = $region17
    $region16: #{tpu_custom_call.1} parent=1 // pred_region
      _
    $region17: #{tpu_custom_call.1} parent=1 // pred_fallthru
      _
    %v18 = vld [vmem:[%s2] sm:$0xff]
    %v19 = vld [vmem:[%s2 + $0x8] sm:$0xff]
    %v20 = vld [vmem:[%s2 + $0x10] sm:$0xff]
    %v21 = vld [vmem:[%s2 + $0x18] sm:$0xff]
    %v22 = vld [vmem:[%s3] sm:$0xff]
    %v23 = vld [vmem:[%s0] sm:$0xf]
    %vm24 = vcmask 31744
    %v26 = vsel %vm24, %v18, 0
    %v29 = vsel %vm24, %v19, 0
    %vm31 = vcmask 1043456
    %v33 = vsel %vm31, %v23, 0
    %35 = vmatprep.subr.mxu0 0.0
    %36 = vmatpush1.msra.mxu0 %v33
    %37 = vmatprep.subr.mxu0 0.0
    %38 = vmatpush1.msra.mxu0 0.0
    %39 = vmatprep.subr.mxu0 0.0
    %40 = vmatpush1.msra.mxu0 0.0
    %41 = vmatprep.subr.mxu0 0.0
    %42 = vmatpush1.msra.mxu0 0.0
    %43 = vmatprep.subr.mxu0 0.0
    %44 = vmatpush1.msra.mxu0 0.0
    %45 = vmatprep.subr.mxu0 0.0
    %46 = vmatpush1.msra.mxu0 0.0
    %47 = vmatprep.subr.mxu0 0.0
    %48 = vmatpush1.msra.mxu0 0.0
    %49 = vmatprep.subr.mxu0 0.0
    %50 = vmatpush1.msra.mxu0 0.0
    %51 = vmatprep.subr.mxu0 0.0
    %52 = vmatpush1.msra.mxu0 0.0
    %53 = vmatprep.subr.mxu0 0.0
    %54 = vmatpush1.msra.mxu0 0.0
    %55 = vmatprep.subr.mxu0 0.0
    %56 = vmatpush1.msra.mxu0 0.0
    %57 = vmatprep.subr.mxu0 0.0
    %58 = vmatpush1.msra.mxu0 0.0
    %59 = vmatprep.subr.mxu0 0.0
    %60 = vmatpush1.msra.mxu0 0.0
    %61 = vmatprep.subr.mxu0 0.0
    %62 = vmatpush1.msra.mxu0 0.0
    %63 = vmatprep.subr.mxu0 0.0
    %64 = vmatpush1.msra.mxu0 0.0
    %65 = vmatprep.subr.mxu0 0.0
    %66 = vmatpush1.msra.mxu0 0.0
    %67 = vmatprep.subr.mxu0 0.0
    %68 = vmatpush1.msra.mxu0 0.0
    %69 = vmatprep.subr.mxu0 0.0
    %70 = vmatpush1.msra.mxu0 0.0
    %71 = vmatprep.subr.mxu0 0.0
    %72 = vmatpush1.msra.mxu0 0.0
    %73 = vmatprep.subr.mxu0 0.0
    %74 = vmatpush1.msra.mxu0 0.0
    %75 = vmatprep.subr.mxu0 0.0
    %76 = vmatpush1.msra.mxu0 0.0
    %77 = vmatprep.subr.mxu0 0.0
    %78 = vmatpush1.msra.mxu0 0.0
    %79 = vmatprep.subr.mxu0 0.0
    %80 = vmatpush1.msra.mxu0 0.0
    %81 = vmatprep.subr.mxu0 0.0
    %82 = vmatpush1.msra.mxu0 0.0
    %83 = vmatprep.subr.mxu0 0.0
    %84 = vmatpush1.msra.mxu0 0.0
    %85 = vmatprep.subr.mxu0 0.0
    %86 = vmatpush1.msra.mxu0 0.0
    %87 = vmatprep.subr.mxu0 0.0
    %88 = vmatpush1.msra.mxu0 0.0
    %89 = vmatprep.subr.mxu0 0.0
    %90 = vmatpush1.msra.mxu0 0.0
    %91 = vmatprep.subr.mxu0 0.0
    %92 = vmatpush1.msra.mxu0 0.0
    %93 = vmatprep.subr.mxu0 0.0
    %94 = vmatpush1.msra.mxu0 0.0
    %95 = vmatprep.subr.mxu0 0.0
    %96 = vmatpush1.msra.mxu0 0.0
    %97 = vmatprep.subr.mxu0 0.0
    %98 = vmatpush1.msra.mxu0 0.0
    %99 = vmatprep.mubr.f32.mxu0 0.0
    %100 = vmatmul.mubr.f32.gmra.mrb[0].mxu0 %v26
    %v101 = vpop.f32.mrb[0].mxu0
    %v102 = vadd.f32 0.0, %v101
    %v103 = vpop.f32.mrb[0].mxu0
    %104 = vmatprep.mubr.f32.mxu0 0.0
    %105 = vmatmul.mubr.f32.gmra.mrb[0].mxu0 %v29
    %v106 = vpop.f32.mrb[0].mxu0
    %v107 = vadd.f32 0.0, %v106
    %v108 = vpop.f32.mrb[0].mxu0
    %109 = vdwg.mxu0
    %v110 = vld [vmem:[%s1] sm:$0xf]
    %v112 = vsel %vm24, %v20, 0
    %v115 = vsel %vm24, %v21, 0
    %v118 = vsel %vm31, %v110, 0
    %120 = vmatprep.subr.mxu0 0.0
    %121 = vmatpush1.msra.mxu0 %v118
    %122 = vmatprep.subr.mxu0 0.0
    %123 = vmatpush1.msra.mxu0 0.0
    %124 = vmatprep.subr.mxu0 0.0
    %125 = vmatpush1.msra.mxu0 0.0
    %126 = vmatprep.subr.mxu0 0.0
    %127 = vmatpush1.msra.mxu0 0.0
    %128 = vmatprep.subr.mxu0 0.0
    %129 = vmatpush1.msra.mxu0 0.0
    %130 = vmatprep.subr.mxu0 0.0
    %131 = vmatpush1.msra.mxu0 0.0
    %132 = vmatprep.subr.mxu0 0.0
    %133 = vmatpush1.msra.mxu0 0.0
    %134 = vmatprep.subr.mxu0 0.0
    %135 = vmatpush1.msra.mxu0 0.0
    %136 = vmatprep.subr.mxu0 0.0
    %137 = vmatpush1.msra.mxu0 0.0
    %138 = vmatprep.subr.mxu0 0.0
    %139 = vmatpush1.msra.mxu0 0.0
    %140 = vmatprep.subr.mxu0 0.0
    %141 = vmatpush1.msra.mxu0 0.0
    %142 = vmatprep.subr.mxu0 0.0
    %143 = vmatpush1.msra.mxu0 0.0
    %144 = vmatprep.subr.mxu0 0.0
    %145 = vmatpush1.msra.mxu0 0.0
    %146 = vmatprep.subr.mxu0 0.0
    %147 = vmatpush1.msra.mxu0 0.0
    %148 = vmatprep.subr.mxu0 0.0
    %149 = vmatpush1.msra.mxu0 0.0
    %150 = vmatprep.subr.mxu0 0.0
    %151 = vmatpush1.msra.mxu0 0.0
    %152 = vmatprep.subr.mxu0 0.0
    %153 = vmatpush1.msra.mxu0 0.0
    %154 = vmatprep.subr.mxu0 0.0
    %155 = vmatpush1.msra.mxu0 0.0
    %156 = vmatprep.subr.mxu0 0.0
    %157 = vmatpush1.msra.mxu0 0.0
    %158 = vmatprep.subr.mxu0 0.0
    %159 = vmatpush1.msra.mxu0 0.0
    %160 = vmatprep.subr.mxu0 0.0
    %161 = vmatpush1.msra.mxu0 0.0
    %162 = vmatprep.subr.mxu0 0.0
    %163 = vmatpush1.msra.mxu0 0.0
    %164 = vmatprep.subr.mxu0 0.0
    %165 = vmatpush1.msra.mxu0 0.0
    %166 = vmatprep.subr.mxu0 0.0
    %167 = vmatpush1.msra.mxu0 0.0
    %168 = vmatprep.subr.mxu0 0.0
    %169 = vmatpush1.msra.mxu0 0.0
    %170 = vmatprep.subr.mxu0 0.0
    %171 = vmatpush1.msra.mxu0 0.0
    %172 = vmatprep.subr.mxu0 0.0
    %173 = vmatpush1.msra.mxu0 0.0
    %174 = vmatprep.subr.mxu0 0.0
    %175 = vmatpush1.msra.mxu0 0.0
    %176 = vmatprep.subr.mxu0 0.0
    %177 = vmatpush1.msra.mxu0 0.0
    %178 = vmatprep.subr.mxu0 0.0
    %179 = vmatpush1.msra.mxu0 0.0
    %180 = vmatprep.subr.mxu0 0.0
    %181 = vmatpush1.msra.mxu0 0.0
    %182 = vmatprep.subr.mxu0 0.0
    %183 = vmatpush1.msra.mxu0 0.0
    %184 = vmatprep.mubr.f32.mxu0 0.0
    %185 = vmatmul.mubr.f32.gmra.mrb[0].mxu0 %v112
    %v186 = vpop.f32.mrb[0].mxu0
    %v187 = vadd.f32 0.0, %v186
    %v188 = vpop.f32.mrb[0].mxu0
    %189 = vmatprep.mubr.f32.mxu0 0.0
    %190 = vmatmul.mubr.f32.gmra.mrb[0].mxu0 %v115
    %v191 = vpop.f32.mrb[0].mxu0
    %v192 = vadd.f32 0.0, %v191
    %v193 = vpop.f32.mrb[0].mxu0
    %194 = vdwg.mxu0
    %v195 = vadd.f32 %v107, %v192
    %197 = vset.pattern.permute.xlu0 0
    %198 = vperm.xlu0 %197, %v22
    %v199 = vpop.permute.xlu0 %198
    %v201 = vadd.f32 %v195, %v199
    %v202 = vmul.f32 %v102, %v201
    %v203 = vrot.slane %v202, 4
    %v204 = vadd.f32 %v202, %v203
    %v205 = vrot.slane %v204, 2
    %v206 = vadd.f32 %v204, %v205
    %v207 = vrot.slane %v206, 1
    %v208 = vadd.f32 %v206, %v207
    %v209 = vmul.f32 %v187, %v201
    %v210 = vrot.slane %v209, 4
    %v211 = vadd.f32 %v209, %v210
    %v212 = vrot.slane %v211, 2
    %v213 = vadd.f32 %v211, %v212
    %v214 = vrot.slane %v213, 1
    %v215 = vadd.f32 %v213, %v214
    %v216 = vmax.f32 %v208, %v215
    %v217 = vsub.f32 %v208, %v216
    %v218 = vmul.f32 %v217, 1.442695
    %v219 = vpow.pop %v218
    %v220 = vsub.f32 %v215, %v216
    %v221 = vmul.f32 %v220, 1.442695
    %v222 = vpow.pop %v221
    %v223 = vadd.f32 %v219, %v222
    %v224 = vrcp.pop %v223
    %v225 = vmul.f32 %v219, %v102
    %v226 = vmul.f32 %v222, %v187
    %v227 = vadd.f32 %v225, %v226
    %v228 = vmul.f32 %v227, %v224
    %229 = vst [vmem:[#allocation2] sm:$0xff] %v228
    %s230 = scalar_lea.vmem %s0, 4
    %v231 = vld [vmem:[%s230] sm:$0xf]
    %v233 = vsel %vm31, %v231, 0
    %235 = vmatprep.subr.mxu0 0.0
    %236 = vmatpush1.msra.mxu0 %v233
    %237 = vmatprep.subr.mxu0 0.0
    %238 = vmatpush1.msra.mxu0 0.0
    %239 = vmatprep.subr.mxu0 0.0
    %240 = vmatpush1.msra.mxu0 0.0
    %241 = vmatprep.subr.mxu0 0.0
    %242 = vmatpush1.msra.mxu0 0.0
    %243 = vmatprep.subr.mxu0 0.0
    %244 = vmatpush1.msra.mxu0 0.0
    %245 = vmatprep.subr.mxu0 0.0
    %246 = vmatpush1.msra.mxu0 0.0
    %247 = vmatprep.subr.mxu0 0.0
    %248 = vmatpush1.msra.mxu0 0.0
    %249 = vmatprep.subr.mxu0 0.0
    %250 = vmatpush1.msra.mxu0 0.0
    %251 = vmatprep.subr.mxu0 0.0
    %252 = vmatpush1.msra.mxu0 0.0
    %253 = vmatprep.subr.mxu0 0.0
    %254 = vmatpush1.msra.mxu0 0.0
    %255 = vmatprep.subr.mxu0 0.0
    %256 = vmatpush1.msra.mxu0 0.0
    %257 = vmatprep.subr.mxu0 0.0
    %258 = vmatpush1.msra.mxu0 0.0
    %259 = vmatprep.subr.mxu0 0.0
    %260 = vmatpush1.msra.mxu0 0.0
    %261 = vmatprep.subr.mxu0 0.0
    %262 = vmatpush1.msra.mxu0 0.0
    %263 = vmatprep.subr.mxu0 0.0
    %264 = vmatpush1.msra.mxu0 0.0
    %265 = vmatprep.subr.mxu0 0.0
    %266 = vmatpush1.msra.mxu0 0.0
    %267 = vmatprep.subr.mxu0 0.0
    %268 = vmatpush1.msra.mxu0 0.0
    %269 = vmatprep.subr.mxu0 0.0
    %270 = vmatpush1.msra.mxu0 0.0
    %271 = vmatprep.subr.mxu0 0.0
    %272 = vmatpush1.msra.mxu0 0.0
    %273 = vmatprep.subr.mxu0 0.0
    %274 = vmatpush1.msra.mxu0 0.0
    %275 = vmatprep.subr.mxu0 0.0
    %276 = vmatpush1.msra.mxu0 0.0
    %277 = vmatprep.subr.mxu0 0.0
    %278 = vmatpush1.msra.mxu0 0.0
    %279 = vmatprep.subr.mxu0 0.0
    %280 = vmatpush1.msra.mxu0 0.0
    %281 = vmatprep.subr.mxu0 0.0
    %282 = vmatpush1.msra.mxu0 0.0
    %283 = vmatprep.subr.mxu0 0.0
    %284 = vmatpush1.msra.mxu0 0.0
    %285 = vmatprep.subr.mxu0 0.0
    %286 = vmatpush1.msra.mxu0 0.0
    %287 = vmatprep.subr.mxu0 0.0
    %288 = vmatpush1.msra.mxu0 0.0
    %289 = vmatprep.subr.mxu0 0.0
    %290 = vmatpush1.msra.mxu0 0.0
    %291 = vmatprep.subr.mxu0 0.0
    %292 = vmatpush1.msra.mxu0 0.0
    %293 = vmatprep.subr.mxu0 0.0
    %294 = vmatpush1.msra.mxu0 0.0
    %295 = vmatprep.subr.mxu0 0.0
    %296 = vmatpush1.msra.mxu0 0.0
    %297 = vmatprep.subr.mxu0 0.0
    %298 = vmatpush1.msra.mxu0 0.0
    %299 = vmatprep.mubr.f32.mxu0 0.0
    %300 = vmatmul.mubr.f32.gmra.mrb[0].mxu0 %v26
    %v301 = vpop.f32.mrb[0].mxu0
    %v302 = vadd.f32 0.0, %v301
    %v303 = vpop.f32.mrb[0].mxu0
    %304 = vmatprep.mubr.f32.mxu0 0.0
    %305 = vmatmul.mubr.f32.gmra.mrb[0].mxu0 %v29
    %v306 = vpop.f32.mrb[0].mxu0
    %v307 = vadd.f32 0.0, %v306
    %v308 = vpop.f32.mrb[0].mxu0
    %309 = vdwg.mxu0
    %s310 = scalar_lea.vmem %s1, 4
    %v311 = vld [vmem:[%s310] sm:$0xf]
    %v313 = vsel %vm31, %v311, 0
    %315 = vmatprep.subr.mxu0 0.0
    %316 = vmatpush1.msra.mxu0 %v313
    %317 = vmatprep.subr.mxu0 0.0
    %318 = vmatpush1.msra.mxu0 0.0
    %319 = vmatprep.subr.mxu0 0.0
    %320 = vmatpush1.msra.mxu0 0.0
    %321 = vmatprep.subr.mxu0 0.0
    %322 = vmatpush1.msra.mxu0 0.0
    %323 = vmatprep.subr.mxu0 0.0
    %324 = vmatpush1.msra.mxu0 0.0
    %325 = vmatprep.subr.mxu0 0.0
    %326 = vmatpush1.msra.mxu0 0.0
    %327 = vmatprep.subr.mxu0 0.0
    %328 = vmatpush1.msra.mxu0 0.0
    %329 = vmatprep.subr.mxu0 0.0
    %330 = vmatpush1.msra.mxu0 0.0
    %331 = vmatprep.subr.mxu0 0.0
    %332 = vmatpush1.msra.mxu0 0.0
    %333 = vmatprep.subr.mxu0 0.0
    %334 = vmatpush1.msra.mxu0 0.0
    %335 = vmatprep.subr.mxu0 0.0
    %336 = vmatpush1.msra.mxu0 0.0
    %337 = vmatprep.subr.mxu0 0.0
    %338 = vmatpush1.msra.mxu0 0.0
    %339 = vmatprep.subr.mxu0 0.0
    %340 = vmatpush1.msra.mxu0 0.0
    %341 = vmatprep.subr.mxu0 0.0
    %342 = vmatpush1.msra.mxu0 0.0
    %343 = vmatprep.subr.mxu0 0.0
    %344 = vmatpush1.msra.mxu0 0.0
    %345 = vmatprep.subr.mxu0 0.0
    %346 = vmatpush1.msra.mxu0 0.0
    %347 = vmatprep.subr.mxu0 0.0
    %348 = vmatpush1.msra.mxu0 0.0
    %349 = vmatprep.subr.mxu0 0.0
    %350 = vmatpush1.msra.mxu0 0.0
    %351 = vmatprep.subr.mxu0 0.0
    %352 = vmatpush1.msra.mxu0 0.0
    %353 = vmatprep.subr.mxu0 0.0
    %354 = vmatpush1.msra.mxu0 0.0
    %355 = vmatprep.subr.mxu0 0.0
    %356 = vmatpush1.msra.mxu0 0.0
    %357 = vmatprep.subr.mxu0 0.0
    %358 = vmatpush1.msra.mxu0 0.0
    %359 = vmatprep.subr.mxu0 0.0
    %360 = vmatpush1.msra.mxu0 0.0
    %361 = vmatprep.subr.mxu0 0.0
    %362 = vmatpush1.msra.mxu0 0.0
    %363 = vmatprep.subr.mxu0 0.0
    %364 = vmatpush1.msra.mxu0 0.0
    %365 = vmatprep.subr.mxu0 0.0
    %366 = vmatpush1.msra.mxu0 0.0
    %367 = vmatprep.subr.mxu0 0.0
    %368 = vmatpush1.msra.mxu0 0.0
    %369 = vmatprep.subr.mxu0 0.0
    %370 = vmatpush1.msra.mxu0 0.0
    %371 = vmatprep.subr.mxu0 0.0
    %372 = vmatpush1.msra.mxu0 0.0
    %373 = vmatprep.subr.mxu0 0.0
    %374 = vmatpush1.msra.mxu0 0.0
    %375 = vmatprep.subr.mxu0 0.0
    %376 = vmatpush1.msra.mxu0 0.0
    %377 = vmatprep.subr.mxu0 0.0
    %378 = vmatpush1.msra.mxu0 0.0
    %379 = vmatprep.mubr.f32.mxu0 0.0
    %380 = vmatmul.mubr.f32.gmra.mrb[0].mxu0 %v112
    %v381 = vpop.f32.mrb[0].mxu0
    %v382 = vadd.f32 0.0, %v381
    %v383 = vpop.f32.mrb[0].mxu0
    %384 = vmatprep.mubr.f32.mxu0 0.0
    %385 = vmatmul.mubr.f32.gmra.mrb[0].mxu0 %v115
    %v386 = vpop.f32.mrb[0].mxu0
    %v387 = vadd.f32 0.0, %v386
    %v388 = vpop.f32.mrb[0].mxu0
    %389 = vdwg.mxu0
    %v390 = vadd.f32 %v307, %v387
    %v391 = vadd.f32 %v390, %v199
    %v392 = vmul.f32 %v302, %v391
    %v393 = vrot.slane %v392, 4
    %v394 = vadd.f32 %v392, %v393
    %v395 = vrot.slane %v394, 2
    %v396 = vadd.f32 %v394, %v395
    %v397 = vrot.slane %v396, 1
    %v398 = vadd.f32 %v396, %v397
    %v399 = vmul.f32 %v382, %v391
    %v400 = vrot.slane %v399, 4
    %v401 = vadd.f32 %v399, %v400
    %v402 = vrot.slane %v401, 2
    %v403 = vadd.f32 %v401, %v402
    %v404 = vrot.slane %v403, 1
    %v405 = vadd.f32 %v403, %v404
    %v406 = vmax.f32 %v398, %v405
    %v407 = vsub.f32 %v398, %v406
    %v408 = vmul.f32 %v407, 1.442695
    %v409 = vpow.pop %v408
    %v410 = vsub.f32 %v405, %v406
    %v411 = vmul.f32 %v410, 1.442695
    %v412 = vpow.pop %v411
    %v413 = vadd.f32 %v409, %v412
    %v414 = vrcp.pop %v413
    %v415 = vmul.f32 %v409, %v302
    %v416 = vmul.f32 %v412, %v382
    %v417 = vadd.f32 %v415, %v416
    %v418 = vmul.f32 %v417, %v414
    %s419 = scalar_lea.vmem [#allocation2], 8
    %420 = vst [vmem:[%s419] sm:$0xff] %v418
    // Predicated region
    $region18: #{tpu_custom_call.1} parent=1 // pred_check
      _
    $region19: #{tpu_custom_call.1} parent=1 // pred_check_branch
      %422 = sbr.rel (0) target = $region21
    $region20: #{tpu_custom_call.1} parent=1 // pred_region
      %s424 = ssub.s32 256, 256
      %425 = vsyncadd [#allocation3], %s424
      %s426 = sshll.u32 [#allocation2], 4
      %s427 = int_to_ptr.vmem [resolvable:$true] %s426
      %432 = dma.vmem_to_hbm [thread:$0]  %s427, 256, %s4, [#allocation3], 128, 128, 8
    $region21: #{tpu_custom_call.1} parent=1 // pred_fallthru
      _
    // Predicated region
    $region22: #{tpu_custom_call.1} parent=1 // pred_check
      _
    $region23: #{tpu_custom_call.1} parent=1 // pred_check_branch
      %434 = sbr.rel (0) target = $region25
    $region24: #{tpu_custom_call.1} parent=1 // pred_region
      %435 = dma.done [#allocation3], 256
    $region25: #{tpu_custom_call.1} parent=1 // pred_fallthru
      _
    %436 = vsyncpa [#allocation3], 1

</llo_original>
